<compile_context>
chip_gen: v7x
topology: tpu7x:2x2x1
jax: 0.10.0
libtpu: 0.0.40
codegen_flags: <defaults>
</compile_context>

<pallas_src>
import jax
import jax.numpy as jnp
from jax.experimental import pallas as pl
from jax.experimental.pallas import tpu as pltpu


def _copy_kernel(x_ref, o_ref):
    # Straight copy of the current tile.
    o_ref[...] = x_ref[...]


def _round_down(v, m):
    return (v // m) * m


def _tpu_params():
    """(vmem_capacity_bytes, num_tensorcores) with conservative fallbacks."""
    vmem_cap = 64 << 20   # v7x-sized fallback (smallest of the three gens)
    num_cores = 1         # conservative: skip megacore split if unknown
    try:
        info = pltpu.get_tpu_info()
        vmem_cap = int(getattr(info, "vmem_capacity_bytes", vmem_cap))
        for attr in ("num_tensorcores", "tensorcores_per_chip",
                     "num_cores", "cores_per_chip"):
            val = getattr(info, attr, None)
            if val is not None:
                num_cores = int(val)
                break
    except Exception:
        pass
    return vmem_cap, num_cores


def _copy_2d(x2d):
    """Stream a 2D array through a Pallas copy kernel (no pad, no slice)."""
    R, C = x2d.shape
    dtype = x2d.dtype
    itemsize = jnp.dtype(dtype).itemsize
    vmem_cap, num_cores = _tpu_params()

    # ~8 MiB blocks on every generation; 2 (in/out) x 2 (double-buffer) = 32 MiB.
    block_bytes = 8 << 20
    epb = max(1, block_bytes // itemsize)  # elements per block

    if R * C <= epb:
        # Whole array in one block (both dims equal the full array dims).
        block_r, block_c = R, C
    elif 8 * C <= epb:
        # Full-width row slabs; ragged last row block handled by the grid.
        block_r = _round_down(epb // C, 8)
        block_c = C
    else:
        # Rows are huge: tile the lane dimension in multiples of 128.
        block_r = 8 if R >= 8 else R
        block_c = max(128, _round_down(epb // block_r, 128))

    grid_r = pl.cdiv(R, block_r)
    grid_c = pl.cdiv(C, block_c)

    # Only split a single-block copy for the megacore when the chip really
    # has 2 TensorCores and both halves get equal, aligned work.
    if num_cores >= 2 and grid_r * grid_c == 1:
        if R >= 16 and R % 16 == 0:
            block_r = R // 2
            grid_r = 2
        elif C >= 256 and C % 256 == 0:
            block_c = C // 2
            grid_c = 2

    vmem_limit = int(min(40 << 20, (vmem_cap * 5) // 8))

    return pl.pallas_call(
        _copy_kernel,
        out_shape=jax.ShapeDtypeStruct((R, C), dtype),
        grid_spec=pltpu.PrefetchScalarGridSpec(
            num_scalar_prefetch=0,
            grid=(grid_r, grid_c),
            in_specs=[pl.BlockSpec((block_r, block_c), lambda i, j: (i, j))],
            out_specs=pl.BlockSpec((block_r, block_c), lambda i, j: (i, j)),
        ),
        compiler_params=pltpu.CompilerParams(
            dimension_semantics=("parallel", "parallel"),
            vmem_limit_bytes=vmem_limit,
        ),
        cost_estimate=pl.CostEstimate(
            flops=0,
            transcendentals=0,
            bytes_accessed=2 * R * C * itemsize,
        ),
    )(x2d)


def _materialized_flatten(x, n, feat):
    total = n * feat

    # Fast path: conv-style feature maps have feat % 128 == 0, so the natural
    # (n, feat) view is already lane-dense -- no re-tiling at all.
    # Also take this path when total isn't 128-divisible (rare ragged case):
    # the copy is then lane-ragged (masked stores) but still 1x traffic.
    if feat % 128 == 0 or total % 128 != 0:
        return _copy_2d(jnp.reshape(x, (n, feat)))

    # total % 128 == 0 but feat isn't: re-tile the flat buffer (metadata-only
    # reshape) into a lane-dense slab. LANES is picked to divide total exactly
    # so there is never a pad or a trailing slice.
    for lanes in (1024, 512, 256, 128):
        if total % lanes == 0:
            rows = total // lanes
            out2d = _copy_2d(jnp.reshape(x, (rows, lanes)))
            return jnp.reshape(out2d, (n, feat))
    # Unreachable: lanes=128 always divides total here.
    return _copy_2d(jnp.reshape(x, (n, feat)))


def flatten_forward(x, *, materialize=False):
    """Equivalent of PyTorch Flatten: x.view(x.shape[0], -1).

    The default (and recommended) path is metadata-only: a row-major flatten
    needs no HBM traffic and no kernel. Set materialize=True only if a fresh
    contiguous buffer is genuinely required; prefer XLA-level aliasing/donation
    when possible.
    """
    n = x.shape[0]
    feat = 1
    for d in x.shape[1:]:
        feat *= d
    if not materialize:
        # TODO(synk): in a full model, fuse this reshape into the consumer
        # kernel's BlockSpec instead of materializing anything.
        return jnp.reshape(x, (n, feat))
    return _materialized_flatten(x, n, feat)


if __name__ == "__main__":
    key = jax.random.PRNGKey(0)

    # NCHW input, consistent with a conv feature map feeding Flatten.
    x = jax.random.normal(key, (2, 4, 16, 16), dtype=jnp.float32)
    ref = jnp.reshape(x, (x.shape[0], -1))

    # Materialized (Pallas kernel) path -- lane-dense fast path (feat=1024).
    out_kernel = jax.block_until_ready(flatten_forward(x, materialize=True))
    assert out_kernel.shape == (2, 4 * 16 * 16), out_kernel.shape
    assert out_kernel.dtype == x.dtype
    assert bool(jnp.array_equal(out_kernel, ref))

    # Ragged shape (feat and total not multiples of 128) exercises the
    # full-array-block path with no pad/slice.
    x2 = jax.random.normal(jax.random.PRNGKey(1), (3, 5, 7), dtype=jnp.float32)
    ref2 = jnp.reshape(x2, (3, -1))
    out2 = jax.block_until_ready(flatten_forward(x2, materialize=True))
    assert out2.shape == (3, 35)
    assert bool(jnp.array_equal(out2, ref2))

    # Default metadata-only path.
    out_view = jax.block_until_ready(flatten_forward(x))
    assert out_view.shape == (2, 4 * 16 * 16)
    assert bool(jnp.array_equal(out_view, ref))

    print("KERNEL_OK")
</pallas_src>

<mosaic_0001>
module attributes {stable_mosaic.version = 11 : i64} {
  func.func @_copy_kernel(%arg0: i32, %arg1: i32, %arg2: memref<2x1024xf32, #tpu.memory_space<vmem>>, %arg3: memref<2x1024xf32, #tpu.memory_space<vmem>>) attributes {dimension_semantics = [#tpu.dimension_semantics<parallel>, #tpu.dimension_semantics<parallel>], iteration_bounds = array<i64: 1, 1>, scalar_prefetch = 0 : i64, scratch_operands = 0 : i64, tpu.core_type = #tpu.core_type<tc>, window_params = [{transform_indices = @transform_0, window_bounds = array<i64: 2, 1024>}, {transform_indices = @transform_1, window_bounds = array<i64: 2, 1024>}]} {
    %c0 = arith.constant 0 : index
    %c0_0 = arith.constant 0 : index
    %0 = vector.load %arg2[%c0, %c0_0] : memref<2x1024xf32, #tpu.memory_space<vmem>>, vector<2x1024xf32>
    %c0_1 = arith.constant 0 : index
    %c0_2 = arith.constant 0 : index
    %1 = vector.load %arg3[%c0_1, %c0_2] : memref<2x1024xf32, #tpu.memory_space<vmem>>, vector<2x1024xf32>
    tpu.vector_store %arg3[%c0_1, %c0_2], %0 {strides = array<i32>} : memref<2x1024xf32, #tpu.memory_space<vmem>>, vector<2x1024xf32>,
    return
  }
  func.func @transform_0(%arg0: i32, %arg1: i32) -> (i32, i32) {
    %c0_i32 = arith.constant 0 : i32
    return %arg0, %arg1 : i32, i32
  }
  func.func @transform_1(%arg0: i32, %arg1: i32) -> (i32, i32) {
    %c0_i32 = arith.constant 0 : i32
    return %arg0, %arg1 : i32, i32
  }
}

</mosaic_0001>

<llo_original>
// kernel: tpu_custom_call.1
$region0: #{tpu_custom_call.1}
  #allocation0 [shape = 'u32[]', space=smem, size = 0x4, offset = 0x4, fixed_abs, tag = 'smem constant byte address 0x4 - core index']
  #allocation1 [shape = 'u32[144,128]{1,0:T(1,128)}', space=vmem, size = 0x12000, scoped, tag = 'internal scratch']
  %s0 = inlined_call_operand.hbm [shape: f32[2,1024], index: 0, kind: input, shape index: {}]
  %s1 = inlined_call_operand.hbm [shape: f32[2,1024], index: 1, kind: output, shape index: {}]
  %s2 = sld [smem:[#allocation0]]
  $region18: #{tpu_custom_call.1} parent=0
    _
  %s4 = ssub.s32 1, %s2
  %s5 = scalar_select 0, %s4, %s2
  $region1: #{tpu_custom_call.1} parent=0
    #allocation2 [shape = 'u8[8192]{0}', space=vmem, size = 0x2000, scoped, tag = 'input window, operand 0, single buffered']
    #allocation3 [shape = 's32[1]{0}', space=sflag, size = 0x4, scoped, tag = 'scoped memory for tpu_custom_call.1']
    #allocation4 [shape = 's32[1]{0}', space=sflag, size = 0x4, scoped, tag = 'scoped memory for tpu_custom_call.1']
    #allocation5 [shape = 'u8[8192]{0}', space=vmem, size = 0x2000, scoped, tag = 'output window, operand 0, single buffered']
    %6 = vsyncpa [#allocation3], 0
    %7 = vsyncpa [#allocation4], 0
    // Predicated region
    $region2: #{tpu_custom_call.1} parent=1 // pred_check
      _
    $region3: #{tpu_custom_call.1} parent=1 // pred_check_branch
      %9 = sbr.rel (0) target = $region5
    $region4: #{tpu_custom_call.1} parent=1 // pred_region
      %s11 = ssub.s32 256, 256
      %12 = vsyncadd [#allocation3], %s11
      %s14 = sshll.u32 [#allocation2], 4
      %s15 = int_to_ptr.vmem [resolvable:$true] %s14
      %17 = dma.hbm_to_vmem [thread:$0]  %s0, 256, %s15, [#allocation3]
    $region5: #{tpu_custom_call.1} parent=1 // pred_fallthru
      _
    // Predicated region
    $region6: #{tpu_custom_call.1} parent=1 // pred_check
      _
    $region7: #{tpu_custom_call.1} parent=1 // pred_check_branch
      %19 = sbr.rel (0) target = $region9
    $region8: #{tpu_custom_call.1} parent=1 // pred_region
      %20 = dma.done [#allocation3], 256
    $region9: #{tpu_custom_call.1} parent=1 // pred_fallthru
      _
    %v21 = vld [vmem:[#allocation2] sm:$0xff]
    %v22 = vld [vmem:[#allocation2 + $0x8] sm:$0xff]
    %23 = vst [vmem:[#allocation5] sm:$0xff] %v21
    %24 = vst [vmem:[#allocation5 + $0x8] sm:$0xff] %v22
    // Predicated region
    $region10: #{tpu_custom_call.1} parent=1 // pred_check
      _
    $region11: #{tpu_custom_call.1} parent=1 // pred_check_branch
      %26 = sbr.rel (0) target = $region13
    $region12: #{tpu_custom_call.1} parent=1 // pred_region
      %s28 = ssub.s32 256, 256
      %29 = vsyncadd [#allocation4], %s28
      %s31 = sshll.u32 [#allocation5], 4
      %s32 = int_to_ptr.vmem [resolvable:$true] %s31
      %34 = dma.vmem_to_hbm [thread:$0]  %s32, 256, %s1, [#allocation4]
    $region13: #{tpu_custom_call.1} parent=1 // pred_fallthru
      _
    // Predicated region
    $region14: #{tpu_custom_call.1} parent=1 // pred_check
      _
    $region15: #{tpu_custom_call.1} parent=1 // pred_check_branch
      %36 = sbr.rel (0) target = $region17
    $region16: #{tpu_custom_call.1} parent=1 // pred_region
      %37 = dma.done [#allocation4], 256
    $region17: #{tpu_custom_call.1} parent=1 // pred_fallthru
      _
    %38 = vsyncpa [#allocation3], 1
    %39 = vsyncpa [#allocation4], 1

</llo_original>
